<compile_context>
chip_gen: v5e
topology: v5e:2x2
jax: 0.10.0
libtpu: 0.0.40
codegen_flags: <defaults>
</compile_context>

<pallas_src>
import jax
import jax.numpy as jnp
from jax import lax
from jax.experimental import pallas as pl
from jax.experimental.pallas import tpu as pltpu

# Model dims (NetConfig)
S_IN = 2    # state_shape
H1 = 25
H2 = 50
NA = 3      # action_shape

# Packed-parameter buffer layout: one f32 (128, 64) slab, sections 8-row aligned
# where it matters.  Everything else in the buffer is zero padding.
PACK_ROWS = 128
PACK_COLS = 64
ROW_W1 = 0    # rows 0..1   : l1 weight (2, 25)
ROW_B1 = 2    # row  2      : l1 bias   (1, 25)
ROW_B2 = 3    # row  3      : l2 bias   (1, 50)
ROW_BF = 4    # row  4      : [actor_lin1 bias | l3 bias] (1, 28)
ROW_BC = 5    # row  5      : critic_lin1 bias (1, 1)
ROW_W2 = 8    # rows 8..32  : l2 weight (25, 50)
ROW_WF = 40   # rows 40..89 : [actor_lin1 W | l3 W] (50, 28)
ROW_WC = 96   # rows 96..120: critic_lin1 weight (25, 1)


def actor_critic_kernel(x_ref, p_ref, out_ref):
    x = x_ref[...]                                        # (B, 2) f32

    # F.normalize(x, dim=0):  x / max(||col||_2, 1e-12)
    # == x * rsqrt(max(sum(x^2), 1e-24))  (exact rsqrt, keeps divide off the path)
    ssq = jnp.sum(x * x, axis=0, keepdims=True)           # (1, 2)
    inv = lax.rsqrt(jnp.maximum(ssq, 1e-24))
    xn = x * inv

    # y = relu(l1(x)) — K=2 contraction done on the VPU (an MXU matmul here is
    # >98% padding and pays a full push/drain round trip for nothing).
    w1r0 = p_ref[ROW_W1:ROW_W1 + 1, 0:H1]                 # (1, 25)
    w1r1 = p_ref[ROW_W1 + 1:ROW_W1 + 2, 0:H1]             # (1, 25)
    b1 = p_ref[ROW_B1:ROW_B1 + 1, 0:H1]                   # (1, 25)
    y = xn[:, 0:1] * w1r0 + xn[:, 1:2] * w1r1 + b1        # (B, 25)
    y = jnp.maximum(y, 0.0)

    # y = relu(l2(y)) — MXU
    w2 = p_ref[ROW_W2:ROW_W2 + H1, 0:H2]                  # (25, 50)
    b2 = p_ref[ROW_B2:ROW_B2 + 1, 0:H2]                   # (1, 50)
    y = jnp.dot(y, w2, preferred_element_type=jnp.float32) + b2
    y = jnp.maximum(y, 0.0)                               # (B, 50)

    # Fused head: one matmul produces [actor_lin1(y) | l3(y)] in (B, 28).
    wf = p_ref[ROW_WF:ROW_WF + H2, 0:NA + H1]             # (50, 28)
    bf = p_ref[ROW_BF:ROW_BF + 1, 0:NA + H1]              # (1, 28)
    h = jnp.dot(y, wf, preferred_element_type=jnp.float32) + bf

    # actor = log_softmax(..., dim=0)  (reduction over the BATCH axis, as in torch)
    a = h[:, 0:NA]                                        # (B, 3)
    a_max = jnp.max(a, axis=0, keepdims=True)
    a_shift = a - a_max
    lse = jnp.log(jnp.sum(jnp.exp(a_shift), axis=0, keepdims=True))
    out_ref[:, 0:NA] = a_shift - lse

    # c = relu(l3(y.detach())); critic = tanh(critic_lin1(c))
    c = jnp.maximum(h[:, NA:NA + H1], 0.0)                # (B, 25)
    wc = p_ref[ROW_WC:ROW_WC + H1, 0:1]                   # (25, 1)
    bc = p_ref[ROW_BC:ROW_BC + 1, 0:1]                    # (1, 1)
    critic = jnp.tanh(jnp.dot(c, wc, preferred_element_type=jnp.float32) + bc)
    out_ref[:, NA:NA + 1] = critic                        # (B, 1)


def pack_params(params):
    """Pack the 10 (weight, bias) arrays into one lane-aligned (128, 64) f32 slab.

    Weights are (in_features, out_features); biases are (1, out_features).
    actor_lin1 / l3 weights (both LHS = y) are concatenated for the fused matmul.
    """
    (w1, b1, w2, b2, wa, ba, w3, b3, wc, bc) = params
    wf = jnp.concatenate([wa, w3], axis=1)                # (50, 28)
    bf = jnp.concatenate([ba, b3], axis=1)                # (1, 28)
    buf = jnp.zeros((PACK_ROWS, PACK_COLS), jnp.float32)
    buf = buf.at[ROW_W1:ROW_W1 + S_IN, 0:H1].set(w1)
    buf = buf.at[ROW_B1:ROW_B1 + 1, 0:H1].set(b1)
    buf = buf.at[ROW_B2:ROW_B2 + 1, 0:H2].set(b2)
    buf = buf.at[ROW_BF:ROW_BF + 1, 0:NA + H1].set(bf)
    buf = buf.at[ROW_BC:ROW_BC + 1, 0:1].set(bc)
    buf = buf.at[ROW_W2:ROW_W2 + H1, 0:H2].set(w2)
    buf = buf.at[ROW_WF:ROW_WF + H2, 0:NA + H1].set(wf)
    buf = buf.at[ROW_WC:ROW_WC + H1, 0:1].set(wc)
    return buf


def actor_critic_forward(x, packed_params):
    """x: (B, 2) f32, packed_params: (128, 64) f32.  Returns (actor (B,3), critic (B,1))."""
    B = x.shape[0]
    vmem = pl.BlockSpec(memory_space=pltpu.MemorySpace.VMEM)
    # Tiny, latency-bound custom call: tell XLA it is cheap.
    flops = 2 * B * (S_IN * H1 + H1 * H2 + H2 * (NA + H1) + H1 * 1)
    bytes_accessed = (x.size + packed_params.size + B * (NA + 1)) * 4
    transcendentals = B * NA + NA + B + S_IN              # exp + log + tanh + rsqrt
    out = pl.pallas_call(
        actor_critic_kernel,
        out_shape=jax.ShapeDtypeStruct((B, NA + 1), jnp.float32),
        in_specs=[vmem, vmem],
        out_specs=vmem,
        cost_estimate=pl.CostEstimate(
            flops=flops,
            transcendentals=transcendentals,
            bytes_accessed=bytes_accessed,
        ),
    )(x, packed_params)
    return out[:, :NA], out[:, NA:NA + 1]
    # TODO(synk): if B is scaled to vectorized-env sizes, grid over B and
    # restructure the axis=0 normalize/log-softmax as a two-pass (stats, apply)
    # scheme; at B=8 a grid is pure overhead.


def init_params(key, state_shape=S_IN, action_shape=NA):
    """PyTorch-Linear-style init: uniform(-1/sqrt(fan_in), 1/sqrt(fan_in)).

    Weights returned as (in_features, out_features); biases as (1, out)."""
    def linear(k, fan_in, fan_out):
        kw, kb = jax.random.split(k)
        bound = 1.0 / (fan_in ** 0.5)
        w = jax.random.uniform(kw, (fan_in, fan_out), jnp.float32, -bound, bound)
        b = jax.random.uniform(kb, (1, fan_out), jnp.float32, -bound, bound)
        return w, b

    keys = jax.random.split(key, 5)
    w1, b1 = linear(keys[0], state_shape, H1)
    w2, b2 = linear(keys[1], H1, H2)
    wa, ba = linear(keys[2], H2, action_shape)
    w3, b3 = linear(keys[3], H2, H1)
    wc, bc = linear(keys[4], H1, 1)
    return (w1, b1, w2, b2, wa, ba, w3, b3, wc, bc)


def reference_forward(x, params):
    """Pure-JAX reference (mirrors the PyTorch module) for correctness check."""
    (w1, b1, w2, b2, wa, ba, w3, b3, wc, bc) = params
    xn = x / jnp.maximum(jnp.sqrt(jnp.sum(x * x, axis=0, keepdims=True)), 1e-12)
    y = jnp.maximum(xn @ w1 + b1, 0.0)
    y = jnp.maximum(y @ w2 + b2, 0.0)
    actor = jax.nn.log_softmax(y @ wa + ba, axis=0)
    c = jnp.maximum(y @ w3 + b3, 0.0)
    critic = jnp.tanh(c @ wc + bc)
    return actor, critic


if __name__ == "__main__":
    key = jax.random.PRNGKey(0)
    k_x, k_p = jax.random.split(key)

    B = 8
    x = jax.random.normal(k_x, (B, S_IN), dtype=jnp.float32)
    params = init_params(k_p)
    packed = pack_params(params)

    actor, critic = actor_critic_forward(x, packed)
    jax.block_until_ready((actor, critic))

    actor_ref, critic_ref = reference_forward(x, params)
    assert actor.shape == (B, NA) and critic.shape == (B, 1)
    assert jnp.allclose(actor, actor_ref, atol=1e-5, rtol=1e-5)
    assert jnp.allclose(critic, critic_ref, atol=1e-5, rtol=1e-5)

    print("KERNEL_OK")
</pallas_src>

<mosaic_0001>
module attributes {stable_mosaic.version = 11 : i64} {
  func.func @actor_critic_kernel(%arg0: memref<8x2xf32, #tpu.memory_space<vmem>>, %arg1: memref<128x64xf32, #tpu.memory_space<vmem>>, %arg2: memref<8x4xf32, #tpu.memory_space<vmem>>) attributes {dimension_semantics = [], scalar_prefetch = 0 : i64, scratch_operands = 0 : i64, tpu.core_type = #tpu.core_type<tc>} {
    %c0 = arith.constant 0 : index
    %c0_0 = arith.constant 0 : index
    %0 = vector.load %arg0[%c0, %c0_0] : memref<8x2xf32, #tpu.memory_space<vmem>>, vector<8x2xf32>
    %1 = arith.mulf %0, %0 : vector<8x2xf32>
    %cst = arith.constant dense<0.000000e+00> : vector<2xf32>
    %2 = vector.multi_reduction <add>, %1, %cst [0] : vector<8x2xf32> to vector<2xf32>
    %3 = vector.shape_cast %2 : vector<2xf32> to vector<1x2xf32>
    %cst_1 = arith.constant 1.000000e-24 : f32
    %4 = vector.broadcast %cst_1 : f32 to vector<1x2xf32>
    %5 = arith.maximumf %3, %4 : vector<1x2xf32>
    %6 = math.rsqrt %5 : vector<1x2xf32>
    %7 = vector.broadcast %6 : vector<1x2xf32> to vector<8x2xf32>
    %8 = arith.mulf %0, %7 : vector<8x2xf32>
    %c0_2 = arith.constant 0 : index
    %c0_3 = arith.constant 0 : index
    %9 = vector.load %arg1[%c0_2, %c0_3] : memref<128x64xf32, #tpu.memory_space<vmem>>, vector<1x25xf32>
    %c1 = arith.constant 1 : index
    %c0_4 = arith.constant 0 : index
    %10 = vector.load %arg1[%c1, %c0_4] : memref<128x64xf32, #tpu.memory_space<vmem>>, vector<1x25xf32>
    %c2 = arith.constant 2 : index
    %c0_5 = arith.constant 0 : index
    %11 = vector.load %arg1[%c2, %c0_5] : memref<128x64xf32, #tpu.memory_space<vmem>>, vector<1x25xf32>
    %12 = vector.extract_strided_slice %8 {offsets = [0, 0], sizes = [8, 1], strides = [1, 1]} : vector<8x2xf32> to vector<8x1xf32>
    %13 = vector.broadcast %12 : vector<8x1xf32> to vector<8x25xf32>
    %14 = vector.broadcast %9 : vector<1x25xf32> to vector<8x25xf32>
    %15 = arith.mulf %13, %14 : vector<8x25xf32>
    %16 = vector.extract_strided_slice %8 {offsets = [0, 1], sizes = [8, 1], strides = [1, 1]} : vector<8x2xf32> to vector<8x1xf32>
    %17 = vector.broadcast %16 : vector<8x1xf32> to vector<8x25xf32>
    %18 = vector.broadcast %10 : vector<1x25xf32> to vector<8x25xf32>
    %19 = arith.mulf %17, %18 : vector<8x25xf32>
    %20 = arith.addf %15, %19 : vector<8x25xf32>
    %21 = vector.broadcast %11 : vector<1x25xf32> to vector<8x25xf32>
    %22 = arith.addf %20, %21 : vector<8x25xf32>
    %cst_6 = arith.constant 0.000000e+00 : f32
    %23 = vector.broadcast %cst_6 : f32 to vector<8x25xf32>
    %24 = arith.maximumf %22, %23 : vector<8x25xf32>
    %c8 = arith.constant 8 : index
    %c0_7 = arith.constant 0 : index
    %25 = vector.load %arg1[%c8, %c0_7] : memref<128x64xf32, #tpu.memory_space<vmem>>, vector<25x50xf32>
    %c3 = arith.constant 3 : index
    %c0_8 = arith.constant 0 : index
    %26 = vector.load %arg1[%c3, %c0_8] : memref<128x64xf32, #tpu.memory_space<vmem>>, vector<1x50xf32>
    %cst_9 = arith.constant dense<0.000000e+00> : vector<8x50xf32>
    %27 = tpu.matmul %24, %25, %cst_9 {dimension_numbers = #tpu.dot_dimension_numbers<[1], [0], [0], [1], [0, 0, 1, 1], [], []>} : vector<8x25xf32>, vector<25x50xf32>, vector<8x50xf32> -> vector<8x50xf32>
    %28 = vector.broadcast %26 : vector<1x50xf32> to vector<8x50xf32>
    %29 = arith.addf %27, %28 : vector<8x50xf32>
    %cst_10 = arith.constant 0.000000e+00 : f32
    %30 = vector.broadcast %cst_10 : f32 to vector<8x50xf32>
    %31 = arith.maximumf %29, %30 : vector<8x50xf32>
    %c40 = arith.constant 40 : index
    %c0_11 = arith.constant 0 : index
    %32 = vector.load %arg1[%c40, %c0_11] : memref<128x64xf32, #tpu.memory_space<vmem>>, vector<50x28xf32>
    %c4 = arith.constant 4 : index
    %c0_12 = arith.constant 0 : index
    %33 = vector.load %arg1[%c4, %c0_12] : memref<128x64xf32, #tpu.memory_space<vmem>>, vector<1x28xf32>
    %cst_13 = arith.constant dense<0.000000e+00> : vector<8x28xf32>
    %34 = tpu.matmul %31, %32, %cst_13 {dimension_numbers = #tpu.dot_dimension_numbers<[1], [0], [0], [1], [0, 0, 1, 1], [], []>} : vector<8x50xf32>, vector<50x28xf32>, vector<8x28xf32> -> vector<8x28xf32>
    %35 = vector.broadcast %33 : vector<1x28xf32> to vector<8x28xf32>
    %36 = arith.addf %34, %35 : vector<8x28xf32>
    %37 = vector.extract_strided_slice %36 {offsets = [0, 0], sizes = [8, 3], strides = [1, 1]} : vector<8x28xf32> to vector<8x3xf32>
    %cst_14 = arith.constant dense<0xFF800000> : vector<3xf32>
    %38 = vector.multi_reduction <maximumf>, %37, %cst_14 [0] : vector<8x3xf32> to vector<3xf32>
    %39 = vector.shape_cast %38 : vector<3xf32> to vector<1x3xf32>
    %40 = vector.broadcast %39 : vector<1x3xf32> to vector<8x3xf32>
    %41 = arith.subf %37, %40 : vector<8x3xf32>
    %42 = math.exp %41 : vector<8x3xf32>
    %cst_15 = arith.constant dense<0.000000e+00> : vector<3xf32>
    %43 = vector.multi_reduction <add>, %42, %cst_15 [0] : vector<8x3xf32> to vector<3xf32>
    %44 = vector.shape_cast %43 : vector<3xf32> to vector<1x3xf32>
    %45 = math.log %44 : vector<1x3xf32>
    %46 = vector.broadcast %45 : vector<1x3xf32> to vector<8x3xf32>
    %47 = arith.subf %41, %46 : vector<8x3xf32>
    %c0_16 = arith.constant 0 : index
    %c0_17 = arith.constant 0 : index
    %48 = vector.load %arg2[%c0_16, %c0_17] : memref<8x4xf32, #tpu.memory_space<vmem>>, vector<8x3xf32>
    tpu.vector_store %arg2[%c0_16, %c0_17], %47 {strides = array<i32>} : memref<8x4xf32, #tpu.memory_space<vmem>>, vector<8x3xf32>,
    %49 = vector.extract_strided_slice %36 {offsets = [0, 3], sizes = [8, 25], strides = [1, 1]} : vector<8x28xf32> to vector<8x25xf32>
    %cst_18 = arith.constant 0.000000e+00 : f32
    %50 = vector.broadcast %cst_18 : f32 to vector<8x25xf32>
    %51 = arith.maximumf %49, %50 : vector<8x25xf32>
    %c96 = arith.constant 96 : index
    %c0_19 = arith.constant 0 : index
    %52 = vector.load %arg1[%c96, %c0_19] : memref<128x64xf32, #tpu.memory_space<vmem>>, vector<25x1xf32>
    %c5 = arith.constant 5 : index
    %c0_20 = arith.constant 0 : index
    %53 = vector.load %arg1[%c5, %c0_20] : memref<128x64xf32, #tpu.memory_space<vmem>>, vector<1x1xf32>
    %cst_21 = arith.constant dense<0.000000e+00> : vector<8x1xf32>
    %54 = tpu.matmul %51, %52, %cst_21 {dimension_numbers = #tpu.dot_dimension_numbers<[1], [0], [0], [1], [0, 0, 1, 1], [], []>} : vector<8x25xf32>, vector<25x1xf32>, vector<8x1xf32> -> vector<8x1xf32>
    %55 = vector.broadcast %53 : vector<1x1xf32> to vector<8x1xf32>
    %56 = arith.addf %54, %55 : vector<8x1xf32>
    %57 = math.tanh %56 : vector<8x1xf32>
    %c0_22 = arith.constant 0 : index
    %c3_23 = arith.constant 3 : index
    %58 = vector.load %arg2[%c0_22, %c3_23] : memref<8x4xf32, #tpu.memory_space<vmem>>, vector<8x1xf32>
    tpu.vector_store %arg2[%c0_22, %c3_23], %57 {strides = array<i32>} : memref<8x4xf32, #tpu.memory_space<vmem>>, vector<8x1xf32>,
    return
  }
}

</mosaic_0001>

<llo_original>
// kernel: tpu_custom_call.1
$region0: #{tpu_custom_call.1}
  #allocation0 [shape = 'u32[]', space=smem, size = 0x4, offset = 0x4, fixed_abs, tag = 'smem constant byte address 0x4 - core index']
  #allocation1 [shape = 'u32[72,128]{1,0:T(1,128)}', space=vmem, size = 0x9000, scoped, tag = 'internal scratch']
  %s0 = inlined_call_operand.vmem [shape: f32[8,2], index: 0, kind: input, shape index: {}]
  %s1 = inlined_call_operand.vmem [shape: f32[128,64], index: 1, kind: input, shape index: {}]
  %s2 = inlined_call_operand.vmem [shape: f32[8,4], index: 2, kind: output, shape index: {}]
  %s3 = sld [smem:[#allocation0]]
  $region18: #{tpu_custom_call.1} parent=0
    _
  %s5 = ssub.s32 1, %s3
  %s6 = scalar_select 0, %s5, %s3
  // Predicated region
  $region2: #{tpu_custom_call.1} parent=0 // pred_check
    _
  $region3: #{tpu_custom_call.1} parent=0 // pred_check_branch
    %8 = sbr.rel (0) target = $region5
  $region4: #{tpu_custom_call.1} parent=0 // pred_region
    _
  $region5: #{tpu_custom_call.1} parent=0 // pred_fallthru
    _
  // Predicated region
  $region6: #{tpu_custom_call.1} parent=0 // pred_check
    _
  $region7: #{tpu_custom_call.1} parent=0 // pred_check_branch
    %10 = sbr.rel (0) target = $region9
  $region8: #{tpu_custom_call.1} parent=0 // pred_region
    _
  $region9: #{tpu_custom_call.1} parent=0 // pred_fallthru
    _
  %v11 = vld [vmem:[%s0] sm:$0xff]
  %v12 = vmul.f32 %v11, %v11
  %vm13 = vcmask 15360
  %v14 = vsel %vm13, %v12, 0.0
  %v15 = vrot.slane %v14, 4
  %v16 = vadd.f32 %v14, %v15
  %v17 = vrot.slane %v16, 2
  %v18 = vadd.f32 %v16, %v17
  %v19 = vrot.slane %v18, 1
  %v20 = vadd.f32 %v18, %v19
  %v21 = vmax.f32 %v20, 1e-24
  %v22 = vrsqrt.pop %v21
  %v23 = vmul.f32 %v22, %v21
  %v24 = vmul.f32 %v23, %v22
  %v25 = vmul.f32 0.5, %v24
  %v26 = vsub.f32 1.5, %v25
  %v27 = vmul.f32 %v22, %v26
  %vm28 = vweird.f32 %v21
  %vm29 = vweird.f32 %v22
  %vm30 = vmor %vm28, %vm29
  %v31 = vsel %vm30, %v22, %v27
  %v32 = vmul.f32 %v11, %v31
  %v33 = vld [vmem:[%s1] sm:$0x1]
  %v34 = vld [vmem:[%s1 + $0x1] sm:$0x1]
  %v35 = vld [vmem:[%s1 + $0x2] sm:$0x1]
  %37 = vset.pattern.permute.xlu0 0
  %38 = vperm.xlu0 %37, %v32
  %v39 = vpop.permute.xlu0 %38
  %v41 = vperm.slane %v33, 0
  %v42 = vmul.f32 %v39, %v41
  %43 = vset.pattern.permute.xlu0 1
  %44 = vperm.xlu0 %43, %v32
  %v45 = vpop.permute.xlu0 %44
  %v47 = vperm.slane %v34, 0
  %v48 = vmul.f32 %v45, %v47
  %v49 = vadd.f32 %v42, %v48
  %v50 = vperm.slane %v35, 0
  %v51 = vadd.f32 %v49, %v50
  %v52 = vmax.f32 %v51, 0.0
  %v53 = vld [vmem:[%s1 + $0x8] sm:$0xff]
  %v54 = vld [vmem:[%s1 + $0x10] sm:$0xff]
  %v55 = vld [vmem:[%s1 + $0x18] sm:$0xff]
  %v56 = vld [vmem:[%s1 + $0x20] sm:$0x1]
  %v57 = vld [vmem:[%s1 + $0x3] sm:$0x1]
  %v58 = vperm.slane %v57, 0
  %vm59 = vcmask 203776
  %v61 = vsel %vm59, %v52, 0
  %vm63 = vcmask 1040384
  %v65 = vsel %vm63, %v56, 0
  %67 = vmatpush.msra.mxu0 0.0
  %68 = vmatpush.msra.mxu0 0.0
  %69 = vmatpush.msra.mxu0 0.0
  %70 = vmatpush.msra.mxu0 0.0
  %71 = vmatpush.msra.mxu0 0.0
  %72 = vmatpush.msra.mxu0 0.0
  %73 = vmatpush.msra.mxu0 0.0
  %74 = vmatpush.msra.mxu0 0.0
  %75 = vmatpush.msra.mxu0 0.0
  %76 = vmatpush.msra.mxu0 0.0
  %77 = vmatpush.msra.mxu0 0.0
  %78 = vmatpush.msra.mxu0 0.0
  %79 = vmatpush.msra.mxu0 %v65
  %80 = vmatpush.msra.mxu0 %v55
  %81 = vmatpush.msra.mxu0 %v54
  %82 = vmatpush.msra.mxu0 %v53
  %83 = vmatmul.f32.gmra.mxu0 %v61
  %v84 = vpop.f32.mrf.mxu0
  %v85 = vadd.f32 %v58, %v84
  %86 = vdwg.mxu0
  %v87 = vmax.f32 %v85, 0.0
  %v88 = vld [vmem:[%s1 + $0x28] sm:$0xff]
  %v89 = vld [vmem:[%s1 + $0x30] sm:$0xff]
  %v90 = vld [vmem:[%s1 + $0x38] sm:$0xff]
  %v91 = vld [vmem:[%s1 + $0x40] sm:$0xff]
  %v92 = vld [vmem:[%s1 + $0x48] sm:$0xff]
  %v93 = vld [vmem:[%s1 + $0x50] sm:$0xff]
  %v94 = vld [vmem:[%s1 + $0x58] sm:$0x3]
  %v95 = vld [vmem:[%s1 + $0x4] sm:$0x1]
  %v96 = vperm.slane %v95, 0
  %vm97 = vcmask 408576
  %v99 = vsel %vm97, %v87, 0
  %vm101 = vcmask 1041408
  %v103 = vsel %vm101, %v94, 0
  %105 = vmatpush.msra.mxu0 0.0
  %106 = vmatpush.msra.mxu0 0.0
  %107 = vmatpush.msra.mxu0 0.0
  %108 = vmatpush.msra.mxu0 0.0
  %109 = vmatpush.msra.mxu0 0.0
  %110 = vmatpush.msra.mxu0 0.0
  %111 = vmatpush.msra.mxu0 0.0
  %112 = vmatpush.msra.mxu0 0.0
  %113 = vmatpush.msra.mxu0 0.0
  %114 = vmatpush.msra.mxu0 %v103
  %115 = vmatpush.msra.mxu0 %v93
  %116 = vmatpush.msra.mxu0 %v92
  %117 = vmatpush.msra.mxu0 %v91
  %118 = vmatpush.msra.mxu0 %v90
  %119 = vmatpush.msra.mxu0 %v89
  %120 = vmatpush.msra.mxu0 %v88
  %121 = vmatmul.f32.gmra.mxu0 %v99
  %v122 = vpop.f32.mrf.mxu0
  %v123 = vadd.f32 %v96, %v122
  %124 = vdwg.mxu0
  %vm125 = vcmask 23552
  %v126 = vsel %vm125, %v123, -inf
  %v127 = vrot.slane %v126, 4
  %v128 = vmax.f32 %v126, %v127
  %v129 = vrot.slane %v128, 2
  %v130 = vmax.f32 %v128, %v129
  %v131 = vrot.slane %v130, 1
  %v132 = vmax.f32 %v130, %v131
  %v133 = vsub.f32 %v123, %v132
  %v134 = vmul.f32 %v133, 1.442695
  %v135 = vpow.pop %v134
  %v136 = vsel %vm125, %v135, 0.0
  %v137 = vrot.slane %v136, 4
  %v138 = vadd.f32 %v136, %v137
  %v139 = vrot.slane %v138, 2
  %v140 = vadd.f32 %v138, %v139
  %v141 = vrot.slane %v140, 1
  %v142 = vadd.f32 %v140, %v141
  %v143 = vlog2.pop %v142
  %v144 = vmul.f32 %v143, 0.6931472
  %v145 = vsub.f32 %v133, %v144
  %146 = vst.msk [vmem:[%s2] sm:$0xff] %vm125, %v145
  %v147 = vmax.f32 %v123, 0.0
  %v148 = vld [vmem:[%s1 + $0x60] sm:$0xff]
  %v149 = vld [vmem:[%s1 + $0x68] sm:$0xff]
  %v150 = vld [vmem:[%s1 + $0x70] sm:$0xff]
  %v151 = vld [vmem:[%s1 + $0x78] sm:$0x1]
  %v152 = vld [vmem:[%s1 + $0x5] sm:$0x1]
  %v153 = vperm.slane %v152, 0
  %155 = vrot.lane.b32.xlu0 %v147, 125
  %v156 = vpop.permute.xlu0 %155
  %v157 = vsel %vm59, %v156, 0
  %v160 = vsel %vm63, %v151, 0
  %162 = vmatpush.msra.mxu0 0.0
  %163 = vmatpush.msra.mxu0 0.0
  %164 = vmatpush.msra.mxu0 0.0
  %165 = vmatpush.msra.mxu0 0.0
  %166 = vmatpush.msra.mxu0 0.0
  %167 = vmatpush.msra.mxu0 0.0
  %168 = vmatpush.msra.mxu0 0.0
  %169 = vmatpush.msra.mxu0 0.0
  %170 = vmatpush.msra.mxu0 0.0
  %171 = vmatpush.msra.mxu0 0.0
  %172 = vmatpush.msra.mxu0 0.0
  %173 = vmatpush.msra.mxu0 0.0
  %174 = vmatpush.msra.mxu0 %v160
  %175 = vmatpush.msra.mxu0 %v150
  %176 = vmatpush.msra.mxu0 %v149
  %177 = vmatpush.msra.mxu0 %v148
  %178 = vmatmul.f32.gmra.mxu0 %v157
  %v179 = vpop.f32.mrf.mxu0
  %v180 = vadd.f32 %v153, %v179
  %181 = vdwg.mxu0
  %v182 = vtanh.pop %v180
  %184 = vrot.lane.b32.xlu0 %v182, 3
  %v185 = vpop.permute.xlu0 %184
  %vm187 = vcmask 31768
  %188 = vst.msk [vmem:[%s2] sm:$0xff] %vm187, %v185
  // Predicated region
  $region10: #{tpu_custom_call.1} parent=0 // pred_check
    _
  $region11: #{tpu_custom_call.1} parent=0 // pred_check_branch
    %190 = sbr.rel (0) target = $region13
  $region12: #{tpu_custom_call.1} parent=0 // pred_region
    _
  $region13: #{tpu_custom_call.1} parent=0 // pred_fallthru
    _
  // Predicated region
  $region14: #{tpu_custom_call.1} parent=0 // pred_check
    _
  $region15: #{tpu_custom_call.1} parent=0 // pred_check_branch
    %192 = sbr.rel (0) target = $region17
  $region16: #{tpu_custom_call.1} parent=0 // pred_region
    _
  $region17: #{tpu_custom_call.1} parent=0 // pred_fallthru
    _

</llo_original>
